<compile_context>
chip_gen: v5e
topology: v5e:2x2
jax: 0.10.0
libtpu: 0.0.40
codegen_flags: <defaults>
</compile_context>

<pallas_src>
import jax
import jax.numpy as jnp
from jax.experimental import pallas as pl
from jax.experimental.pallas import tpu as pltpu


_LANE = 128      # lane width (last-dim tiling unit)
_SUBLANE = 8     # f32 sublane width (second-to-last dim unit)


def _round_up(n: int, m: int) -> int:
    return ((n + m - 1) // m) * m


def _proj_head_kernel(x_ref, w1_ref, b1_ref, w2_ref, b2_ref, o_ref):
    """Fused fc1 -> ReLU -> fc2 on one (TB, D_in_p) batch tile.

    Weights/biases are VMEM-resident (constant index_map); only the x tile
    and the output tile stream across the batch grid axis.
    """
    w1 = w1_ref[...]
    w2 = w2_ref[...]
    x = x_ref[...].astype(w1.dtype)

    # h = relu(x @ W1 + b1) — matmul on the MXU with f32 accumulation,
    # bias + ReLU epilogue in f32 on the VPU.
    h = jnp.dot(x, w1, preferred_element_type=jnp.float32)
    h = jnp.maximum(h + b1_ref[...], 0.0)

    # out = h @ W2 + b2
    out = jnp.dot(h.astype(w2.dtype), w2, preferred_element_type=jnp.float32)
    o_ref[...] = (out + b2_ref[...]).astype(o_ref.dtype)


def audio_projection_head(x, w1, b1, w2, b2, *, batch_tile=512, use_bf16=False):
    """x: (B, D_in); w1: (D_in, D_in); w2: (D_in, D_out)  (already [in, out]).

    Returns (B, D_out) in x.dtype.  Matches PyTorch fc2(relu(fc1(x))) with
    the Linear weights stored transposed to [in, out].
    """
    B, D_in = x.shape
    d_in_w, D_out = w2.shape
    assert d_in_w == D_in and w1.shape == (D_in, D_in)
    assert b1.shape == (D_in,) and b2.shape == (D_out,)

    out_dtype = x.dtype

    # --- pad features to lane-dense multiples of 128 --------------------------
    d_in_p = _round_up(D_in, _LANE)
    d_out_p = _round_up(D_out, _LANE)

    # --- batch tiling: sublane aligned (16 rows/vreg for bf16 operands) -------
    row_align = 16 if use_bf16 else _SUBLANE
    tb = min(batch_tile, _round_up(B, row_align))
    tb = _round_up(tb, row_align)
    b_p = _round_up(B, tb)
    n_tiles = b_p // tb

    w_dtype = jnp.bfloat16 if use_bf16 else jnp.float32
    x_dtype = w_dtype if use_bf16 else x.dtype  # halve x DMA bytes in bf16 mode

    # Zero padding keeps the math exact: padded K rows/cols contribute 0,
    # padded bias lanes are 0, padded output lanes are sliced off below.
    x_p = jnp.zeros((b_p, d_in_p), x_dtype).at[:B, :D_in].set(x.astype(x_dtype))
    w1_p = jnp.zeros((d_in_p, d_in_p), w_dtype).at[:D_in, :D_in].set(w1.astype(w_dtype))
    w2_p = jnp.zeros((d_in_p, d_out_p), w_dtype).at[:D_in, :D_out].set(w2.astype(w_dtype))
    b1_p = jnp.zeros((1, d_in_p), jnp.float32).at[0, :D_in].set(b1.astype(jnp.float32))
    b2_p = jnp.zeros((1, d_out_p), jnp.float32).at[0, :D_out].set(b2.astype(jnp.float32))

    itemsize_x = jnp.dtype(x_dtype).itemsize
    itemsize_o = jnp.dtype(out_dtype).itemsize
    itemsize_w = jnp.dtype(w_dtype).itemsize

    cost = pl.CostEstimate(
        flops=2 * b_p * d_in_p * (d_in_p + d_out_p),
        transcendentals=0,
        bytes_accessed=(
            b_p * d_in_p * itemsize_x                              # x in
            + (d_in_p * d_in_p + d_in_p * d_out_p) * itemsize_w    # W1, W2
            + (d_in_p + d_out_p) * 4                               # biases
            + b_p * d_out_p * itemsize_o                           # out
        ),
    )

    # VMEM budget: double-buffered x/out tiles + resident weights/biases
    # + f32 hidden activation, with 2x headroom (mind v7x's 64 MiB ceiling).
    vmem_bytes = (
        2 * tb * d_in_p * itemsize_x
        + 2 * tb * d_out_p * itemsize_o
        + (d_in_p * d_in_p + d_in_p * d_out_p) * itemsize_w
        + (d_in_p + d_out_p) * 4
        + tb * d_in_p * 4
    )
    vmem_limit = int(min(max(2 * vmem_bytes, 32 << 20), 64 << 20))

    out_p = pl.pallas_call(
        _proj_head_kernel,
        out_shape=jax.ShapeDtypeStruct((b_p, d_out_p), out_dtype),
        grid_spec=pl.GridSpec(
            grid=(n_tiles,),
            in_specs=[
                pl.BlockSpec((tb, d_in_p), lambda i: (i, 0)),          # x tile streams
                pl.BlockSpec((d_in_p, d_in_p), lambda i: (0, 0)),      # W1 resident
                pl.BlockSpec((1, d_in_p), lambda i: (0, 0)),           # b1 resident
                pl.BlockSpec((d_in_p, d_out_p), lambda i: (0, 0)),     # W2 resident
                pl.BlockSpec((1, d_out_p), lambda i: (0, 0)),          # b2 resident
            ],
            out_specs=pl.BlockSpec((tb, d_out_p), lambda i: (i, 0)),   # lane-dense out
        ),
        compiler_params=pltpu.CompilerParams(
            dimension_semantics=("parallel",),
            vmem_limit_bytes=vmem_limit,
        ),
        cost_estimate=cost,
    )(x_p, w1_p, b1_p, w2_p, b2_p)

    return out_p[:B, :D_out]


if __name__ == "__main__":
    # Small shapes implied by the module: x: (batch, input_dim).
    batch, input_dim, output_dim = 8, 32, 16

    key = jax.random.PRNGKey(0)
    k_x, k_w1, k_b1, k_w2, k_b2 = jax.random.split(key, 5)

    x = jax.random.normal(k_x, (batch, input_dim), dtype=jnp.float32)

    # nn.Linear params, stored already transposed to [in, out] for x @ W.
    w1 = jax.random.normal(k_w1, (input_dim, input_dim), dtype=jnp.float32) * 0.05
    b1 = jax.random.normal(k_b1, (input_dim,), dtype=jnp.float32) * 0.05
    w2 = jax.random.normal(k_w2, (input_dim, output_dim), dtype=jnp.float32) * 0.05
    b2 = jax.random.normal(k_b2, (output_dim,), dtype=jnp.float32) * 0.05

    out = audio_projection_head(x, w1, b1, w2, b2)
    out = jax.block_until_ready(out)

    # Pure-JAX reference (same semantics as the PyTorch forward).
    ref = jnp.maximum(x @ w1 + b1, 0.0) @ w2 + b2
    assert out.shape == (batch, output_dim)
    assert jnp.allclose(out, ref, atol=1e-5, rtol=1e-5)

    # Also exercise the bf16-matmul path (looser tolerance).
    out_bf16 = jax.block_until_ready(
        audio_projection_head(x, w1, b1, w2, b2, use_bf16=True))
    assert out_bf16.shape == (batch, output_dim)
    assert jnp.allclose(out_bf16, ref, atol=2e-2, rtol=2e-2)

    print("KERNEL_OK")
</pallas_src>

<mosaic_0001>
module attributes {stable_mosaic.version = 11 : i64} {
  func.func @_proj_head_kernel(%arg0: i32, %arg1: memref<8x128xf32, #tpu.memory_space<vmem>>, %arg2: memref<128x128xf32, #tpu.memory_space<vmem>>, %arg3: memref<1x128xf32, #tpu.memory_space<vmem>>, %arg4: memref<128x128xf32, #tpu.memory_space<vmem>>, %arg5: memref<1x128xf32, #tpu.memory_space<vmem>>, %arg6: memref<8x128xf32, #tpu.memory_space<vmem>>) attributes {dimension_semantics = [#tpu.dimension_semantics<parallel>], iteration_bounds = array<i64: 1>, scalar_prefetch = 0 : i64, scratch_operands = 0 : i64, tpu.core_type = #tpu.core_type<tc>, window_params = [{transform_indices = @transform_0, window_bounds = array<i64: 8, 128>}, {pipeline_mode = #tpu.pipeline_mode<synchronous>, transform_indices = @transform_1, window_bounds = array<i64: 128, 128>}, {pipeline_mode = #tpu.pipeline_mode<synchronous>, transform_indices = @transform_2, window_bounds = array<i64: 1, 128>}, {pipeline_mode = #tpu.pipeline_mode<synchronous>, transform_indices = @transform_3, window_bounds = array<i64: 128, 128>}, {pipeline_mode = #tpu.pipeline_mode<synchronous>, transform_indices = @transform_4, window_bounds = array<i64: 1, 128>}, {transform_indices = @transform_5, window_bounds = array<i64: 8, 128>}]} {
    %c0 = arith.constant 0 : index
    %c0_0 = arith.constant 0 : index
    %0 = vector.load %arg2[%c0, %c0_0] : memref<128x128xf32, #tpu.memory_space<vmem>>, vector<128x128xf32>
    %c0_1 = arith.constant 0 : index
    %c0_2 = arith.constant 0 : index
    %1 = vector.load %arg4[%c0_1, %c0_2] : memref<128x128xf32, #tpu.memory_space<vmem>>, vector<128x128xf32>
    %c0_3 = arith.constant 0 : index
    %c0_4 = arith.constant 0 : index
    %2 = vector.load %arg1[%c0_3, %c0_4] : memref<8x128xf32, #tpu.memory_space<vmem>>, vector<8x128xf32>
    %cst = arith.constant dense<0.000000e+00> : vector<8x128xf32>
    %3 = tpu.matmul %2, %0, %cst {dimension_numbers = #tpu.dot_dimension_numbers<[1], [0], [0], [1], [0, 0, 1, 1], [], []>} : vector<8x128xf32>, vector<128x128xf32>, vector<8x128xf32> -> vector<8x128xf32>
    %c0_5 = arith.constant 0 : index
    %c0_6 = arith.constant 0 : index
    %4 = vector.load %arg3[%c0_5, %c0_6] : memref<1x128xf32, #tpu.memory_space<vmem>>, vector<1x128xf32>
    %5 = vector.broadcast %4 : vector<1x128xf32> to vector<8x128xf32>
    %6 = arith.addf %3, %5 : vector<8x128xf32>
    %cst_7 = arith.constant 0.000000e+00 : f32
    %7 = vector.broadcast %cst_7 : f32 to vector<8x128xf32>
    %8 = arith.maximumf %6, %7 : vector<8x128xf32>
    %cst_8 = arith.constant dense<0.000000e+00> : vector<8x128xf32>
    %9 = tpu.matmul %8, %1, %cst_8 {dimension_numbers = #tpu.dot_dimension_numbers<[1], [0], [0], [1], [0, 0, 1, 1], [], []>} : vector<8x128xf32>, vector<128x128xf32>, vector<8x128xf32> -> vector<8x128xf32>
    %c0_9 = arith.constant 0 : index
    %c0_10 = arith.constant 0 : index
    %10 = vector.load %arg5[%c0_9, %c0_10] : memref<1x128xf32, #tpu.memory_space<vmem>>, vector<1x128xf32>
    %11 = vector.broadcast %10 : vector<1x128xf32> to vector<8x128xf32>
    %12 = arith.addf %9, %11 : vector<8x128xf32>
    %c0_11 = arith.constant 0 : index
    %c0_12 = arith.constant 0 : index
    %13 = vector.load %arg6[%c0_11, %c0_12] : memref<8x128xf32, #tpu.memory_space<vmem>>, vector<8x128xf32>
    tpu.vector_store %arg6[%c0_11, %c0_12], %12 {strides = array<i32>} : memref<8x128xf32, #tpu.memory_space<vmem>>, vector<8x128xf32>,
    return
  }
  func.func @transform_0(%arg0: i32) -> (i32, i32) {
    %c0_i32 = arith.constant 0 : i32
    %c0_i32_0 = arith.constant 0 : i32
    return %arg0, %c0_i32 : i32, i32
  }
  func.func @transform_1(%arg0: i32) -> (i32, i32) {
    %c0_i32 = arith.constant 0 : i32
    %c0_i32_0 = arith.constant 0 : i32
    %c0_i32_1 = arith.constant 0 : i32
    return %c0_i32, %c0_i32_0 : i32, i32
  }
  func.func @transform_2(%arg0: i32) -> (i32, i32) {
    %c0_i32 = arith.constant 0 : i32
    %c0_i32_0 = arith.constant 0 : i32
    %c0_i32_1 = arith.constant 0 : i32
    return %c0_i32, %c0_i32_0 : i32, i32
  }
  func.func @transform_3(%arg0: i32) -> (i32, i32) {
    %c0_i32 = arith.constant 0 : i32
    %c0_i32_0 = arith.constant 0 : i32
    %c0_i32_1 = arith.constant 0 : i32
    return %c0_i32, %c0_i32_0 : i32, i32
  }
  func.func @transform_4(%arg0: i32) -> (i32, i32) {
    %c0_i32 = arith.constant 0 : i32
    %c0_i32_0 = arith.constant 0 : i32
    %c0_i32_1 = arith.constant 0 : i32
    return %c0_i32, %c0_i32_0 : i32, i32
  }
  func.func @transform_5(%arg0: i32) -> (i32, i32) {
    %c0_i32 = arith.constant 0 : i32
    %c0_i32_0 = arith.constant 0 : i32
    return %arg0, %c0_i32 : i32, i32
  }
}

</mosaic_0001>

<llo_original>
// kernel: tpu_custom_call.1
$region0: #{tpu_custom_call.1}
  #allocation0 [shape = 'u32[]', space=smem, size = 0x4, offset = 0x4, fixed_abs, tag = 'smem constant byte address 0x4 - core index']
  #allocation1 [shape = 'u32[72,128]{1,0:T(1,128)}', space=vmem, size = 0x9000, scoped, tag = 'internal scratch']
  %s0 = inlined_call_operand.hbm [shape: f32[8,128], index: 0, kind: input, shape index: {}]
  %s1 = inlined_call_operand.hbm [shape: f32[128,128], index: 1, kind: input, shape index: {}]
  %s2 = inlined_call_operand.vmem [shape: f32[1,128], index: 2, kind: input, shape index: {}]
  %s3 = inlined_call_operand.hbm [shape: f32[128,128], index: 3, kind: input, shape index: {}]
  %s4 = inlined_call_operand.vmem [shape: f32[1,128], index: 4, kind: input, shape index: {}]
  %s5 = inlined_call_operand.hbm [shape: f32[8,128], index: 5, kind: output, shape index: {}]
  %s6 = sld [smem:[#allocation0]]
  $region42: #{tpu_custom_call.1} parent=0
    _
  %s8 = ssub.s32 1, %s6
  %s9 = scalar_select 0, %s8, %s6
  $region1: #{tpu_custom_call.1} parent=0
    #allocation2 [shape = 'u8[4096]{0}', space=vmem, size = 0x1000, scoped, tag = 'input window, operand 0, single buffered']
    #allocation3 [shape = 's32[1]{0}', space=sflag, size = 0x4, scoped, tag = 'scoped memory for tpu_custom_call.1']
    #allocation4 [shape = 's32[1]{0}', space=sflag, size = 0x4, scoped, tag = 'scoped memory for tpu_custom_call.1']
    #allocation5 [shape = 'u8[65536]{0}', space=vmem, size = 0x10000, scoped, tag = 'input window, operand 1, single buffered']
    #allocation6 [shape = 's32[1]{0}', space=sflag, size = 0x4, scoped, tag = 'scoped memory for tpu_custom_call.1']
    #allocation7 [shape = 'u8[65536]{0}', space=vmem, size = 0x10000, scoped, tag = 'input window, operand 3, single buffered']
    #allocation8 [shape = 'u8[4096]{0}', space=vmem, size = 0x1000, scoped, tag = 'output window, operand 0, single buffered']
    %10 = vsyncpa [#allocation3], 0
    %11 = vsyncpa [#allocation6], 0
    %12 = vsyncpa [#allocation4], 0
    // Predicated region
    $region2: #{tpu_custom_call.1} parent=1 // pred_check
      _
    $region3: #{tpu_custom_call.1} parent=1 // pred_check_branch
      %14 = sbr.rel (0) target = $region5
    $region4: #{tpu_custom_call.1} parent=1 // pred_region
      %16 = vsyncadd [#allocation3], 0
      %s18 = sshll.u32 %s0, 4
      %s19 = int_to_ptr.hbm [resolvable:$true] %s18
      %s20 = sshll.u32 [#allocation2], 4
      %s21 = int_to_ptr.vmem [resolvable:$true] %s20
      %23 = dma.hbm_to_vmem [thread:$0]  %s19, 128, %s21, [#allocation3]
    $region5: #{tpu_custom_call.1} parent=1 // pred_fallthru
      _
    // Predicated region
    $region6: #{tpu_custom_call.1} parent=1 // pred_check
      _
    $region7: #{tpu_custom_call.1} parent=1 // pred_check_branch
      %25 = sbr.rel (0) target = $region9
    $region8: #{tpu_custom_call.1} parent=1 // pred_region
      %27 = vsyncadd [#allocation6], 0
      %s28 = sshll.u32 %s1, 4
      %s29 = int_to_ptr.hbm [resolvable:$true] %s28
      %s30 = sshll.u32 [#allocation5], 4
      %s31 = int_to_ptr.vmem [resolvable:$true] %s30
      %36 = dma.hbm_to_vmem [thread:$0]  %s29, 2048, %s31, [#allocation6], 128, 128, 8
    $region9: #{tpu_custom_call.1} parent=1 // pred_fallthru
      _
    // Predicated region
    $region10: #{tpu_custom_call.1} parent=1 // pred_check
      _
    $region11: #{tpu_custom_call.1} parent=1 // pred_check_branch
      %38 = sbr.rel (0) target = $region13
    $region12: #{tpu_custom_call.1} parent=1 // pred_region
      _
    $region13: #{tpu_custom_call.1} parent=1 // pred_fallthru
      _
    // Predicated region
    $region14: #{tpu_custom_call.1} parent=1 // pred_check
      _
    $region15: #{tpu_custom_call.1} parent=1 // pred_check_branch
      %40 = sbr.rel (0) target = $region17
    $region16: #{tpu_custom_call.1} parent=1 // pred_region
      %42 = vsyncadd [#allocation6], 0
      %s43 = sshll.u32 %s3, 4
      %s44 = int_to_ptr.hbm [resolvable:$true] %s43
      %s45 = sshll.u32 [#allocation7], 4
      %s46 = int_to_ptr.vmem [resolvable:$true] %s45
      %51 = dma.hbm_to_vmem [thread:$0]  %s44, 2048, %s46, [#allocation6], 128, 128, 8
    $region17: #{tpu_custom_call.1} parent=1 // pred_fallthru
      _
    // Predicated region
    $region18: #{tpu_custom_call.1} parent=1 // pred_check
      _
    $region19: #{tpu_custom_call.1} parent=1 // pred_check_branch
      %53 = sbr.rel (0) target = $region21
    $region20: #{tpu_custom_call.1} parent=1 // pred_region
      _
    $region21: #{tpu_custom_call.1} parent=1 // pred_fallthru
      _
    // Predicated region
    $region22: #{tpu_custom_call.1} parent=1 // pred_check
      _
    $region23: #{tpu_custom_call.1} parent=1 // pred_check_branch
      %55 = sbr.rel (0) target = $region25
    $region24: #{tpu_custom_call.1} parent=1 // pred_region
      %57 = dma.done [#allocation3], 128
    $region25: #{tpu_custom_call.1} parent=1 // pred_fallthru
      _
    // Predicated region
    $region26: #{tpu_custom_call.1} parent=1 // pred_check
      _
    $region27: #{tpu_custom_call.1} parent=1 // pred_check_branch
      %59 = sbr.rel (0) target = $region29
    $region28: #{tpu_custom_call.1} parent=1 // pred_region
      %61 = dma.done [#allocation6], 2048
    $region29: #{tpu_custom_call.1} parent=1 // pred_fallthru
      _
    // Predicated region
    $region30: #{tpu_custom_call.1} parent=1 // pred_check
      _
    $region31: #{tpu_custom_call.1} parent=1 // pred_check_branch
      %63 = sbr.rel (0) target = $region33
    $region32: #{tpu_custom_call.1} parent=1 // pred_region
      %65 = dma.done [#allocation6], 2048
    $region33: #{tpu_custom_call.1} parent=1 // pred_fallthru
      _
    %v66 = vld [vmem:[#allocation5] sm:$0xff]
    %v67 = vld [vmem:[#allocation5 + $0x8] sm:$0xff]
    %v68 = vld [vmem:[#allocation5 + $0x10] sm:$0xff]
    %v69 = vld [vmem:[#allocation5 + $0x18] sm:$0xff]
    %v70 = vld [vmem:[#allocation5 + $0x20] sm:$0xff]
    %v71 = vld [vmem:[#allocation5 + $0x28] sm:$0xff]
    %v72 = vld [vmem:[#allocation5 + $0x30] sm:$0xff]
    %v73 = vld [vmem:[#allocation5 + $0x38] sm:$0xff]
    %v74 = vld [vmem:[#allocation5 + $0x40] sm:$0xff]
    %v75 = vld [vmem:[#allocation5 + $0x48] sm:$0xff]
    %v76 = vld [vmem:[#allocation5 + $0x50] sm:$0xff]
    %v77 = vld [vmem:[#allocation5 + $0x58] sm:$0xff]
    %v78 = vld [vmem:[#allocation5 + $0x60] sm:$0xff]
    %v79 = vld [vmem:[#allocation5 + $0x68] sm:$0xff]
    %v80 = vld [vmem:[#allocation5 + $0x70] sm:$0xff]
    %v81 = vld [vmem:[#allocation5 + $0x78] sm:$0xff]
    %v82 = vld [vmem:[#allocation7] sm:$0xff]
    %v83 = vld [vmem:[#allocation7 + $0x8] sm:$0xff]
    %v84 = vld [vmem:[#allocation7 + $0x10] sm:$0xff]
    %v85 = vld [vmem:[#allocation7 + $0x18] sm:$0xff]
    %v86 = vld [vmem:[#allocation7 + $0x20] sm:$0xff]
    %v87 = vld [vmem:[#allocation7 + $0x28] sm:$0xff]
    %v88 = vld [vmem:[#allocation7 + $0x30] sm:$0xff]
    %v89 = vld [vmem:[#allocation7 + $0x38] sm:$0xff]
    %v90 = vld [vmem:[#allocation7 + $0x40] sm:$0xff]
    %v91 = vld [vmem:[#allocation7 + $0x48] sm:$0xff]
    %v92 = vld [vmem:[#allocation7 + $0x50] sm:$0xff]
    %v93 = vld [vmem:[#allocation7 + $0x58] sm:$0xff]
    %v94 = vld [vmem:[#allocation7 + $0x60] sm:$0xff]
    %v95 = vld [vmem:[#allocation7 + $0x68] sm:$0xff]
    %v96 = vld [vmem:[#allocation7 + $0x70] sm:$0xff]
    %v97 = vld [vmem:[#allocation7 + $0x78] sm:$0xff]
    %v98 = vld [vmem:[#allocation2] sm:$0xff]
    %v99 = vld [vmem:[%s2] sm:$0x1]
    %v101 = vperm.slane %v99, 0
    %103 = vmatpush.msra.mxu0 %v81
    %104 = vmatpush.msra.mxu0 %v80
    %105 = vmatpush.msra.mxu0 %v79
    %106 = vmatpush.msra.mxu0 %v78
    %107 = vmatpush.msra.mxu0 %v77
    %108 = vmatpush.msra.mxu0 %v76
    %109 = vmatpush.msra.mxu0 %v75
    %110 = vmatpush.msra.mxu0 %v74
    %111 = vmatpush.msra.mxu0 %v73
    %112 = vmatpush.msra.mxu0 %v72
    %113 = vmatpush.msra.mxu0 %v71
    %114 = vmatpush.msra.mxu0 %v70
    %115 = vmatpush.msra.mxu0 %v69
    %116 = vmatpush.msra.mxu0 %v68
    %117 = vmatpush.msra.mxu0 %v67
    %118 = vmatpush.msra.mxu0 %v66
    %119 = vmatmul.f32.gmra.mxu0 %v98
    %v120 = vpop.f32.mrf.mxu0
    %v121 = vadd.f32 %v101, %v120
    %122 = vdwg.mxu0
    %v123 = vmax.f32 %v121, 0.0
    %v124 = vld [vmem:[%s4] sm:$0x1]
    %v126 = vperm.slane %v124, 0
    %128 = vmatpush.msra.mxu0 %v97
    %129 = vmatpush.msra.mxu0 %v96
    %130 = vmatpush.msra.mxu0 %v95
    %131 = vmatpush.msra.mxu0 %v94
    %132 = vmatpush.msra.mxu0 %v93
    %133 = vmatpush.msra.mxu0 %v92
    %134 = vmatpush.msra.mxu0 %v91
    %135 = vmatpush.msra.mxu0 %v90
    %136 = vmatpush.msra.mxu0 %v89
    %137 = vmatpush.msra.mxu0 %v88
    %138 = vmatpush.msra.mxu0 %v87
    %139 = vmatpush.msra.mxu0 %v86
    %140 = vmatpush.msra.mxu0 %v85
    %141 = vmatpush.msra.mxu0 %v84
    %142 = vmatpush.msra.mxu0 %v83
    %143 = vmatpush.msra.mxu0 %v82
    %144 = vmatmul.f32.gmra.mxu0 %v123
    %v145 = vpop.f32.mrf.mxu0
    %v146 = vadd.f32 %v126, %v145
    %147 = vdwg.mxu0
    %148 = vst [vmem:[#allocation8] sm:$0xff] %v146
    // Predicated region
    $region34: #{tpu_custom_call.1} parent=1 // pred_check
      _
    $region35: #{tpu_custom_call.1} parent=1 // pred_check_branch
      %150 = sbr.rel (0) target = $region37
    $region36: #{tpu_custom_call.1} parent=1 // pred_region
      %152 = vsyncadd [#allocation4], 0
      %s154 = sshll.u32 [#allocation8], 4
      %s155 = int_to_ptr.vmem [resolvable:$true] %s154
      %s156 = sshll.u32 %s5, 4
      %s157 = int_to_ptr.hbm [resolvable:$true] %s156
      %159 = dma.vmem_to_hbm [thread:$0]  %s155, 128, %s157, [#allocation4]
    $region37: #{tpu_custom_call.1} parent=1 // pred_fallthru
      _
    // Predicated region
    $region38: #{tpu_custom_call.1} parent=1 // pred_check
      _
    $region39: #{tpu_custom_call.1} parent=1 // pred_check_branch
      %161 = sbr.rel (0) target = $region41
    $region40: #{tpu_custom_call.1} parent=1 // pred_region
      %163 = dma.done [#allocation4], 128
    $region41: #{tpu_custom_call.1} parent=1 // pred_fallthru
      _
    %164 = vsyncpa [#allocation3], 1
    %165 = vsyncpa [#allocation6], 1
    %166 = vsyncpa [#allocation4], 1

</llo_original>
